<compile_context>
chip_gen: v7x
topology: tpu7x:2x2x1
jax: 0.10.0
libtpu: 0.0.40
codegen_flags: <defaults>
</compile_context>

<pallas_src>
import functools
import math

import jax
import jax.numpy as jnp
from jax.experimental import pallas as pl
from jax.experimental.pallas import tpu as pltpu


def _round_up(n, m):
    return ((n + m - 1) // m) * m


# --------------------------------------------------------------------------
# Kernel
# --------------------------------------------------------------------------
def _att_kernel(q_ref, k_ref, wq_ref, bq_ref, wkt_ref, wv_ref, bv_ref,
                pred_ref, cow_ref, *, s_valid):
    # q_ref  : (TB, Qd)           k_ref  : (TB, S_pad, Kd)
    # wq_ref : (Qd, Vd)           bq_ref : (1, Vd)   f32
    # wkt_ref: (Vd, Kd)  (pre-scaled W_k^T)          wv_ref : (Kd, Vd)
    # bv_ref : (1, Vd)   f32
    # pred_ref: (TB, Vd) f32      cow_ref: (TB, S_pad) f32
    TB, S, Kd = k_ref.shape

    k3 = k_ref[...]                                                    # (TB, S, Kd) native dtype

    # --- W_q projection (MXU, f32 accumulation), bias in f32 ---
    q_vec = (jnp.dot(q_ref[...], wq_ref[...],
                     preferred_element_type=jnp.float32)
             + bq_ref[...])                                            # (TB, Vd) f32

    # --- W_k folded into the score path (scale already folded into wkt) ---
    kq = jnp.dot(q_vec.astype(wkt_ref.dtype), wkt_ref[...],
                 preferred_element_type=jnp.float32)                   # (TB, Kd) f32

    # --- attention scores over the key dim (native-dtype VPU mul, f32 reduce) ---
    kq_n = kq.astype(k3.dtype)
    scores = jnp.sum(k3 * kq_n[:, None, :], axis=-1,
                     dtype=jnp.float32)                                # (TB, S) f32

    if s_valid < S:  # static: mask padded sequence positions
        pos = jax.lax.broadcasted_iota(jnp.int32, (TB, S), 1)
        scores = jnp.where(pos < s_valid, scores, -jnp.inf)

    # --- softmax over the seq (lane) axis, exact divide (free: HBM-bound) ---
    m = jnp.max(scores, axis=-1, keepdims=True)                        # (TB, 1)
    e = jnp.exp(scores - m)                                            # (TB, S)
    denom = jnp.sum(e, axis=-1, keepdims=True)                         # (TB, 1)
    co_w = e / denom                                                   # (TB, S) f32

    # --- W_v hoisted past the pooling: pool raw keys, then one small matmul ---
    pooled = jnp.sum(k3 * co_w[:, :, None].astype(k3.dtype), axis=1,
                     dtype=jnp.float32)                                # (TB, Kd) f32
    pred = (jnp.dot(pooled.astype(wv_ref.dtype), wv_ref[...],
                    preferred_element_type=jnp.float32)
            + bv_ref[...])                                             # (TB, Vd) f32

    pred_ref[...] = pred.astype(pred_ref.dtype)
    cow_ref[...] = co_w.astype(cow_ref.dtype)


# --------------------------------------------------------------------------
# Tile / VMEM sizing (generation aware)
# --------------------------------------------------------------------------
def _vmem_limits():
    """(vmem_limit_bytes for CompilerParams, per-step tile byte budget)."""
    try:
        cap = int(pltpu.get_tpu_info().vmem_capacity_bytes)
    except Exception:  # pragma: no cover - CPU interpret / older runtimes
        cap = 128 * 1024 * 1024
    # ~48 MiB on v7x (64 MiB physical), ~96 MiB on v5e/v6e (128 MiB physical).
    limit = max(32 * 1024 * 1024, min(int(cap * 0.75), 100 * 1024 * 1024))
    budget = int(limit * 0.7)  # headroom for pipeline buffers / compiler scratch
    return limit, budget


def _is_multi_tensorcore():
    try:
        return "v7" in jax.devices()[0].device_kind.lower()
    except Exception:  # pragma: no cover
        return False


def _pick_batch_tile(B, S, Qd, Kd, Vd, key_itemsize, budget_bytes,
                     prefer_multi_step):
    """Largest legal batch tile TB (TB % 8 == 0 or TB == B) whose per-step
    VMEM footprint fits the byte budget.  On multi-TC chips prefer >=2 grid
    steps so dimension_semantics=('parallel',) can shard across cores."""
    lane_k = _round_up(Kd, 128)
    lane_s = _round_up(S, 128)
    lane_v = _round_up(Vd, 128)
    lane_q = _round_up(Qd, 128)
    sub_s = _round_up(S, 8)

    def step_bytes(tb):
        sub_tb = _round_up(tb, 8)
        key_blk = sub_tb * sub_s * lane_k * key_itemsize      # one key buffer
        work = 2 * sub_tb * sub_s * lane_k * 4                # f32 elementwise temps
        rows = 4 * sub_tb * lane_s * 4                        # scores / e / co_w
        outs = 2 * (sub_tb * lane_v * 4 + sub_tb * lane_s * 4)
        q_blk = 2 * sub_tb * lane_q * key_itemsize
        weights = (_round_up(Qd, 8) * lane_v + _round_up(Vd, 8) * lane_k
                   + _round_up(Kd, 8) * lane_v + 2 * 8 * lane_v) * 4
        return 2 * key_blk + work + rows + outs + q_blk + 2 * weights

    cands = [d for d in range(1, B + 1)
             if B % d == 0 and (d % 8 == 0 or d == B)]
    if prefer_multi_step:
        multi = [d for d in cands if B // d >= 2]
        if multi and any(step_bytes(d) <= budget_bytes for d in multi):
            cands = multi
    fitting = [d for d in cands if step_bytes(d) <= budget_bytes]
    if fitting:
        return max(fitting)
    # TODO(synk): add an S (sequence) grid axis marked "arbitrary" with online-
    # softmax accumulators for configurations where even the smallest legal
    # batch tile exceeds the VMEM budget (very long sequences).
    return min(cands)


# --------------------------------------------------------------------------
# Wrapper
# --------------------------------------------------------------------------
def att_layer_forward(query, key_mat, wq, bq, wk, wv, bv, *, compute_dtype=None):
    """query: (B, Qd); key_mat: (B, S, Kd).
    wq: (Qd, Vd); bq: (1, Vd); wk, wv: (Kd, Vd); bv: (1, Vd).
    Returns (pred: (B, Vd) f32, co_weights: (B, S, 1) f32).
    compute_dtype=jnp.bfloat16 halves the dominant key_mat HBM read on
    v6e/v7x (accumulation stays f32); default f32 for bit-close parity."""
    B, Qd = query.shape
    _, S, Kd = key_mat.shape
    Vd = wq.shape[1]

    # Fold 1/sqrt(value_dim) into the transposed W_k (one-time, host side).
    wkt = (wk.T / math.sqrt(float(Vd))).astype(wk.dtype)               # (Vd, Kd)

    if compute_dtype is not None:
        query = query.astype(compute_dtype)
        key_mat = key_mat.astype(compute_dtype)
        wq = wq.astype(compute_dtype)
        wkt = wkt.astype(compute_dtype)
        wv = wv.astype(compute_dtype)
        # Biases stay f32; accumulation stays f32 via preferred_element_type.

    # Pad the sequence axis to a multiple of 8 so (TB, S, Kd) blocks stay
    # layout-aligned; padded rows are masked to -inf before the softmax.
    S_pad = _round_up(S, 8)
    if S_pad != S:
        key_mat = jnp.pad(key_mat, ((0, 0), (0, S_pad - S), (0, 0)))

    vmem_limit, vmem_budget = _vmem_limits()
    key_isz = jnp.dtype(key_mat.dtype).itemsize
    TB = _pick_batch_tile(B, S_pad, Qd, Kd, Vd, key_isz, vmem_budget,
                          prefer_multi_step=_is_multi_tensorcore())
    n_tiles = B // TB

    # Dtype- and algorithm-accurate cost estimate (W_v already hoisted).
    flops = int(2 * B * Qd * Vd          # W_q projection
                + 2 * B * Vd * Kd        # folded W_k matvec
                + 2 * B * S_pad * Kd     # scores
                + 2 * B * S_pad * Kd     # softmax-weighted key pooling
                + 2 * B * Kd * Vd)       # hoisted W_v projection
    bytes_accessed = int(
        query.size * jnp.dtype(query.dtype).itemsize
        + key_mat.size * key_isz
        + wq.size * jnp.dtype(wq.dtype).itemsize
        + wkt.size * jnp.dtype(wkt.dtype).itemsize
        + wv.size * jnp.dtype(wv.dtype).itemsize
        + (bq.size + bv.size) * 4
        + B * Vd * 4 + B * S_pad * 4)

    kernel = functools.partial(_att_kernel, s_valid=S)

    pred, cow = pl.pallas_call(
        kernel,
        out_shape=(
            jax.ShapeDtypeStruct((B, Vd), jnp.float32),      # pred
            jax.ShapeDtypeStruct((B, S_pad), jnp.float32),   # co_weights, lane-dense
        ),
        grid_spec=pltpu.PrefetchScalarGridSpec(
            num_scalar_prefetch=0,
            grid=(n_tiles,),
            in_specs=[
                pl.BlockSpec((TB, Qd), lambda b: (b, 0)),
                pl.BlockSpec((TB, S_pad, Kd), lambda b: (b, 0, 0)),
                pl.BlockSpec((Qd, Vd), lambda b: (0, 0)),
                pl.BlockSpec((1, Vd), lambda b: (0, 0)),
                pl.BlockSpec((Vd, Kd), lambda b: (0, 0)),
                pl.BlockSpec((Kd, Vd), lambda b: (0, 0)),
                pl.BlockSpec((1, Vd), lambda b: (0, 0)),
            ],
            out_specs=[
                pl.BlockSpec((TB, Vd), lambda b: (b, 0)),
                pl.BlockSpec((TB, S_pad), lambda b: (b, 0)),
            ],
        ),
        compiler_params=pltpu.CompilerParams(
            dimension_semantics=("parallel",),
            vmem_limit_bytes=int(vmem_limit)),
        cost_estimate=pl.CostEstimate(
            flops=flops,
            transcendentals=int(B * S_pad),
            bytes_accessed=bytes_accessed),
    )(query, key_mat, wq, bq, wkt, wv, bv)

    # Match PyTorch's (B, S, 1) co_weights shape outside the kernel.
    return pred, cow[:, :S].reshape(B, S, 1)


# --------------------------------------------------------------------------
# Test harness
# --------------------------------------------------------------------------
def _xavier_normal(key, in_dim, out_dim):
    # nn.init.xavier_normal_ on a PyTorch (out, in) weight: std = sqrt(2/(in+out)).
    std = math.sqrt(2.0 / (in_dim + out_dim))
    # Stored transposed as (in, out) so the kernel computes x @ W.
    return std * jax.random.normal(key, (in_dim, out_dim), dtype=jnp.float32)


def _reference(query, key_mat, wq, bq, wk, wv, bv, dim):
    q_vec = (query @ wq + bq)[:, :, None]                    # (B, Vd, 1)
    key_set = key_mat @ wk                                   # (B, S, Vd)
    val_set = key_mat @ wv + bv                              # (B, S, Vd)
    weights = jnp.matmul(key_set, q_vec) / math.sqrt(dim)    # (B, S, 1)
    co_w = jax.nn.softmax(weights, axis=1)
    pred = jnp.sum(val_set * co_w, axis=1)
    return pred, co_w


if __name__ == "__main__":
    B, S = 2, 8
    query_dim, key_dim, value_dim = 32, 48, 32

    root = jax.random.PRNGKey(0)
    k_q, k_k, k_v, k_x1, k_x2 = jax.random.split(root, 5)

    # Deterministic "xavier_normal" parameters; biases init to zero per init_weight.
    wq = _xavier_normal(k_q, query_dim, value_dim)
    bq = jnp.zeros((1, value_dim), dtype=jnp.float32)
    wk = _xavier_normal(k_k, key_dim, value_dim)
    wv = _xavier_normal(k_v, key_dim, value_dim)
    bv = jnp.zeros((1, value_dim), dtype=jnp.float32)

    query = jax.random.normal(k_x1, (B, query_dim), dtype=jnp.float32)
    key_mat = jax.random.normal(k_x2, (B, S, key_dim), dtype=jnp.float32)

    # f32 path: bit-close to the PyTorch reference.
    pred, co_w = att_layer_forward(query, key_mat, wq, bq, wk, wv, bv)
    jax.block_until_ready((pred, co_w))

    pred_ref, cow_ref = _reference(query, key_mat, wq, bq, wk, wv, bv, value_dim)
    assert pred.shape == (B, value_dim) and co_w.shape == (B, S, 1)
    assert jnp.allclose(pred, pred_ref, atol=1e-3, rtol=1e-3)
    assert jnp.allclose(co_w, cow_ref, atol=1e-3, rtol=1e-3)

    # bf16 input path (halves the dominant key_mat HBM read; looser tolerance).
    pred_bf, cow_bf = att_layer_forward(query, key_mat, wq, bq, wk, wv, bv,
                                        compute_dtype=jnp.bfloat16)
    jax.block_until_ready((pred_bf, cow_bf))
    assert jnp.allclose(pred_bf, pred_ref, atol=1e-1, rtol=1e-1)
    assert jnp.allclose(cow_bf, cow_ref, atol=1e-1, rtol=1e-1)

    print("KERNEL_OK")
</pallas_src>

<mosaic_0001>
module attributes {stable_mosaic.version = 11 : i64} {
  func.func @_att_kernel(%arg0: i32, %arg1: memref<2x32xf32, #tpu.memory_space<vmem>>, %arg2: memref<2x8x48xf32, #tpu.memory_space<vmem>>, %arg3: memref<32x32xf32, #tpu.memory_space<vmem>>, %arg4: memref<1x32xf32, #tpu.memory_space<vmem>>, %arg5: memref<32x48xf32, #tpu.memory_space<vmem>>, %arg6: memref<48x32xf32, #tpu.memory_space<vmem>>, %arg7: memref<1x32xf32, #tpu.memory_space<vmem>>, %arg8: memref<2x32xf32, #tpu.memory_space<vmem>>, %arg9: memref<2x8xf32, #tpu.memory_space<vmem>>) attributes {dimension_semantics = [#tpu.dimension_semantics<parallel>], iteration_bounds = array<i64: 1>, scalar_prefetch = 0 : i64, scratch_operands = 0 : i64, tpu.core_type = #tpu.core_type<tc>, window_params = [{transform_indices = @transform_0, window_bounds = array<i64: 2, 32>}, {transform_indices = @transform_1, window_bounds = array<i64: 2, 8, 48>}, {pipeline_mode = #tpu.pipeline_mode<synchronous>, transform_indices = @transform_2, window_bounds = array<i64: 32, 32>}, {pipeline_mode = #tpu.pipeline_mode<synchronous>, transform_indices = @transform_3, window_bounds = array<i64: 1, 32>}, {pipeline_mode = #tpu.pipeline_mode<synchronous>, transform_indices = @transform_4, window_bounds = array<i64: 32, 48>}, {pipeline_mode = #tpu.pipeline_mode<synchronous>, transform_indices = @transform_5, window_bounds = array<i64: 48, 32>}, {pipeline_mode = #tpu.pipeline_mode<synchronous>, transform_indices = @transform_6, window_bounds = array<i64: 1, 32>}, {transform_indices = @transform_7, window_bounds = array<i64: 2, 32>}, {transform_indices = @transform_8, window_bounds = array<i64: 2, 8>}]} {
    %c0 = arith.constant 0 : index
    %c0_0 = arith.constant 0 : index
    %c0_1 = arith.constant 0 : index
    %0 = vector.load %arg2[%c0, %c0_0, %c0_1] : memref<2x8x48xf32, #tpu.memory_space<vmem>>, vector<2x8x48xf32>
    %c0_2 = arith.constant 0 : index
    %c0_3 = arith.constant 0 : index
    %1 = vector.load %arg1[%c0_2, %c0_3] : memref<2x32xf32, #tpu.memory_space<vmem>>, vector<2x32xf32>
    %c0_4 = arith.constant 0 : index
    %c0_5 = arith.constant 0 : index
    %2 = vector.load %arg3[%c0_4, %c0_5] : memref<32x32xf32, #tpu.memory_space<vmem>>, vector<32x32xf32>
    %cst = arith.constant dense<0.000000e+00> : vector<2x32xf32>
    %3 = tpu.matmul %1, %2, %cst {dimension_numbers = #tpu.dot_dimension_numbers<[1], [0], [0], [1], [0, 0, 1, 1], [], []>} : vector<2x32xf32>, vector<32x32xf32>, vector<2x32xf32> -> vector<2x32xf32>
    %c0_6 = arith.constant 0 : index
    %c0_7 = arith.constant 0 : index
    %4 = vector.load %arg4[%c0_6, %c0_7] : memref<1x32xf32, #tpu.memory_space<vmem>>, vector<1x32xf32>
    %5 = vector.broadcast %4 : vector<1x32xf32> to vector<2x32xf32>
    %6 = arith.addf %3, %5 : vector<2x32xf32>
    %c0_8 = arith.constant 0 : index
    %c0_9 = arith.constant 0 : index
    %7 = vector.load %arg5[%c0_8, %c0_9] : memref<32x48xf32, #tpu.memory_space<vmem>>, vector<32x48xf32>
    %cst_10 = arith.constant dense<0.000000e+00> : vector<2x48xf32>
    %8 = tpu.matmul %6, %7, %cst_10 {dimension_numbers = #tpu.dot_dimension_numbers<[1], [0], [0], [1], [0, 0, 1, 1], [], []>} : vector<2x32xf32>, vector<32x48xf32>, vector<2x48xf32> -> vector<2x48xf32>
    %9 = vector.shape_cast %8 : vector<2x48xf32> to vector<2x1x48xf32>
    %10 = vector.broadcast %9 : vector<2x1x48xf32> to vector<2x8x48xf32>
    %11 = arith.mulf %0, %10 : vector<2x8x48xf32>
    %cst_11 = arith.constant dense<0.000000e+00> : vector<2x8xf32>
    %12 = vector.multi_reduction <add>, %11, %cst_11 [2] : vector<2x8x48xf32> to vector<2x8xf32>
    %cst_12 = arith.constant dense<0xFF800000> : vector<2xf32>
    %13 = vector.multi_reduction <maximumf>, %12, %cst_12 [1] : vector<2x8xf32> to vector<2xf32>
    %14 = vector.shape_cast %13 : vector<2xf32> to vector<2x1xf32>
    %15 = vector.broadcast %14 : vector<2x1xf32> to vector<2x8xf32>
    %16 = arith.subf %12, %15 : vector<2x8xf32>
    %17 = math.exp %16 : vector<2x8xf32>
    %cst_13 = arith.constant dense<0.000000e+00> : vector<2xf32>
    %18 = vector.multi_reduction <add>, %17, %cst_13 [1] : vector<2x8xf32> to vector<2xf32>
    %19 = vector.shape_cast %18 : vector<2xf32> to vector<2x1xf32>
    %20 = vector.broadcast %19 : vector<2x1xf32> to vector<2x8xf32>
    %21 = arith.divf %17, %20 : vector<2x8xf32>
    %22 = vector.shape_cast %21 : vector<2x8xf32> to vector<2x8x1xf32>
    %23 = vector.broadcast %22 : vector<2x8x1xf32> to vector<2x8x48xf32>
    %24 = arith.mulf %0, %23 : vector<2x8x48xf32>
    %cst_14 = arith.constant dense<0.000000e+00> : vector<2x48xf32>
    %25 = vector.multi_reduction <add>, %24, %cst_14 [1] : vector<2x8x48xf32> to vector<2x48xf32>
    %c0_15 = arith.constant 0 : index
    %c0_16 = arith.constant 0 : index
    %26 = vector.load %arg6[%c0_15, %c0_16] : memref<48x32xf32, #tpu.memory_space<vmem>>, vector<48x32xf32>
    %cst_17 = arith.constant dense<0.000000e+00> : vector<2x32xf32>
    %27 = tpu.matmul %25, %26, %cst_17 {dimension_numbers = #tpu.dot_dimension_numbers<[1], [0], [0], [1], [0, 0, 1, 1], [], []>} : vector<2x48xf32>, vector<48x32xf32>, vector<2x32xf32> -> vector<2x32xf32>
    %c0_18 = arith.constant 0 : index
    %c0_19 = arith.constant 0 : index
    %28 = vector.load %arg7[%c0_18, %c0_19] : memref<1x32xf32, #tpu.memory_space<vmem>>, vector<1x32xf32>
    %29 = vector.broadcast %28 : vector<1x32xf32> to vector<2x32xf32>
    %30 = arith.addf %27, %29 : vector<2x32xf32>
    %c0_20 = arith.constant 0 : index
    %c0_21 = arith.constant 0 : index
    %31 = vector.load %arg8[%c0_20, %c0_21] : memref<2x32xf32, #tpu.memory_space<vmem>>, vector<2x32xf32>
    tpu.vector_store %arg8[%c0_20, %c0_21], %30 {strides = array<i32>} : memref<2x32xf32, #tpu.memory_space<vmem>>, vector<2x32xf32>,
    %c0_22 = arith.constant 0 : index
    %c0_23 = arith.constant 0 : index
    %32 = vector.load %arg9[%c0_22, %c0_23] : memref<2x8xf32, #tpu.memory_space<vmem>>, vector<2x8xf32>
    tpu.vector_store %arg9[%c0_22, %c0_23], %21 {strides = array<i32>} : memref<2x8xf32, #tpu.memory_space<vmem>>, vector<2x8xf32>,
    return
  }
  func.func @transform_0(%arg0: i32) -> (i32, i32) {
    %c0_i32 = arith.constant 0 : i32
    %c0_i32_0 = arith.constant 0 : i32
    return %arg0, %c0_i32 : i32, i32
  }
  func.func @transform_1(%arg0: i32) -> (i32, i32, i32) {
    %c0_i32 = arith.constant 0 : i32
    %c0_i32_0 = arith.constant 0 : i32
    %c0_i32_1 = arith.constant 0 : i32
    return %arg0, %c0_i32, %c0_i32_0 : i32, i32, i32
  }
  func.func @transform_2(%arg0: i32) -> (i32, i32) {
    %c0_i32 = arith.constant 0 : i32
    %c0_i32_0 = arith.constant 0 : i32
    %c0_i32_1 = arith.constant 0 : i32
    return %c0_i32, %c0_i32_0 : i32, i32
  }
  func.func @transform_3(%arg0: i32) -> (i32, i32) {
    %c0_i32 = arith.constant 0 : i32
    %c0_i32_0 = arith.constant 0 : i32
    %c0_i32_1 = arith.constant 0 : i32
    return %c0_i32, %c0_i32_0 : i32, i32
  }
  func.func @transform_4(%arg0: i32) -> (i32, i32) {
    %c0_i32 = arith.constant 0 : i32
    %c0_i32_0 = arith.constant 0 : i32
    %c0_i32_1 = arith.constant 0 : i32
    return %c0_i32, %c0_i32_0 : i32, i32
  }
  func.func @transform_5(%arg0: i32) -> (i32, i32) {
    %c0_i32 = arith.constant 0 : i32
    %c0_i32_0 = arith.constant 0 : i32
    %c0_i32_1 = arith.constant 0 : i32
    return %c0_i32, %c0_i32_0 : i32, i32
  }
  func.func @transform_6(%arg0: i32) -> (i32, i32) {
    %c0_i32 = arith.constant 0 : i32
    %c0_i32_0 = arith.constant 0 : i32
    %c0_i32_1 = arith.constant 0 : i32
    return %c0_i32, %c0_i32_0 : i32, i32
  }
  func.func @transform_7(%arg0: i32) -> (i32, i32) {
    %c0_i32 = arith.constant 0 : i32
    %c0_i32_0 = arith.constant 0 : i32
    return %arg0, %c0_i32 : i32, i32
  }
  func.func @transform_8(%arg0: i32) -> (i32, i32) {
    %c0_i32 = arith.constant 0 : i32
    %c0_i32_0 = arith.constant 0 : i32
    return %arg0, %c0_i32 : i32, i32
  }
}

</mosaic_0001>

<llo_original>
// kernel: tpu_custom_call.1
$region0: #{tpu_custom_call.1}
  #allocation0 [shape = 'u32[]', space=smem, size = 0x4, offset = 0x4, fixed_abs, tag = 'smem constant byte address 0x4 - core index']
  #allocation1 [shape = 'u32[144,128]{1,0:T(1,128)}', space=vmem, size = 0x12000, scoped, tag = 'internal scratch']
  %s0 = inlined_call_operand.hbm [shape: f32[2,32], index: 0, kind: input, shape index: {}]
  %s1 = inlined_call_operand.hbm [shape: f32[2,8,48], index: 1, kind: input, shape index: {}]
  %s2 = inlined_call_operand.hbm [shape: f32[32,32], index: 2, kind: input, shape index: {}]
  %s3 = inlined_call_operand.hbm [shape: f32[1,32], index: 3, kind: input, shape index: {}]
  %s4 = inlined_call_operand.hbm [shape: f32[32,48], index: 4, kind: input, shape index: {}]
  %s5 = inlined_call_operand.hbm [shape: f32[48,32], index: 5, kind: input, shape index: {}]
  %s6 = inlined_call_operand.hbm [shape: f32[1,32], index: 6, kind: input, shape index: {}]
  %s7 = inlined_call_operand.hbm [shape: f32[2,32], index: 7, kind: output, shape index: {0}]
  %s8 = inlined_call_operand.hbm [shape: f32[2,8], index: 8, kind: output, shape index: {1}]
  %9 = xla_tuple %s7, %s8
  %s10 = sld [smem:[#allocation0]]
  $region74: #{tpu_custom_call.1} parent=0
    _
  %s12 = ssub.s32 1, %s10
  %s13 = scalar_select 0, %s12, %s10
  $region1: #{tpu_custom_call.1} parent=0
    #allocation2 [shape = 'u8[1024]{0}', space=vmem, size = 0x400, scoped, tag = 'input window, operand 0, single buffered']
    #allocation3 [shape = 's32[1]{0}', space=sflag, size = 0x4, scoped, tag = 'scoped memory for tpu_custom_call.1']
    #allocation4 [shape = 's32[1]{0}', space=sflag, size = 0x4, scoped, tag = 'scoped memory for tpu_custom_call.1']
    #allocation5 [shape = 'u8[8192]{0}', space=vmem, size = 0x2000, scoped, tag = 'input window, operand 1, single buffered']
    #allocation6 [shape = 's32[1]{0}', space=sflag, size = 0x4, scoped, tag = 'scoped memory for tpu_custom_call.1']
    #allocation7 [shape = 'u8[16384]{0}', space=vmem, size = 0x4000, scoped, tag = 'input window, operand 2, single buffered']
    #allocation8 [shape = 'u8[512]{0}', space=vmem, size = 0x400, scoped, tag = 'input window, operand 3, single buffered']
    #allocation9 [shape = 's32[1]{0}', space=sflag, size = 0x4, scoped, tag = 'scoped memory for tpu_custom_call.1']
    #allocation10 [shape = 'u8[16384]{0}', space=vmem, size = 0x4000, scoped, tag = 'input window, operand 4, single buffered']
    #allocation11 [shape = 'u8[24576]{0}', space=vmem, size = 0x6000, scoped, tag = 'input window, operand 5, single buffered']
    #allocation12 [shape = 's32[1]{0}', space=sflag, size = 0x4, scoped, tag = 'scoped memory for tpu_custom_call.1']
    #allocation13 [shape = 'u8[512]{0}', space=vmem, size = 0x400, scoped, tag = 'input window, operand 6, single buffered']
    #allocation14 [shape = 'u8[1024]{0}', space=vmem, size = 0x400, scoped, tag = 'output window, operand 0, single buffered']
    #allocation15 [shape = 'u8[1024]{0}', space=vmem, size = 0x400, scoped, tag = 'output window, operand 1, single buffered']
    #allocation16 [shape = 's32[1]{0}', space=sflag, size = 0x4, scoped, tag = 'scoped memory for tpu_custom_call.1']
    %14 = vsyncpa [#allocation3], 0
    %15 = vsyncpa [#allocation6], 0
    %16 = vsyncpa [#allocation9], 0
    %17 = vsyncpa [#allocation12], 0
    %18 = vsyncpa [#allocation4], 0
    %19 = vsyncpa [#allocation16], 0
    // Predicated region
    $region2: #{tpu_custom_call.1} parent=1 // pred_check
      _
    $region3: #{tpu_custom_call.1} parent=1 // pred_check_branch
      %21 = sbr.rel (0) target = $region5
    $region4: #{tpu_custom_call.1} parent=1 // pred_region
      %s23 = ssub.s32 32, 32
      %24 = vsyncadd [#allocation3], %s23
      %s26 = sshll.u32 [#allocation2], 4
      %s27 = int_to_ptr.vmem [resolvable:$true] %s26
      %29 = dma.hbm_to_vmem [thread:$0]  %s0, 32, %s27, [#allocation3]
    $region5: #{tpu_custom_call.1} parent=1 // pred_fallthru
      _
    // Predicated region
    $region6: #{tpu_custom_call.1} parent=1 // pred_check
      _
    $region7: #{tpu_custom_call.1} parent=1 // pred_check_branch
      %31 = sbr.rel (0) target = $region9
    $region8: #{tpu_custom_call.1} parent=1 // pred_region
      %s33 = ssub.s32 256, 256
      %34 = vsyncadd [#allocation6], %s33
      %s35 = sshll.u32 [#allocation5], 4
      %s36 = int_to_ptr.vmem [resolvable:$true] %s35
      %41 = dma.hbm_to_vmem [thread:$0]  %s1, 256, %s36, [#allocation6], 128, 128, 8
    $region9: #{tpu_custom_call.1} parent=1 // pred_fallthru
      _
    // Predicated region
    $region10: #{tpu_custom_call.1} parent=1 // pred_check
      _
    $region11: #{tpu_custom_call.1} parent=1 // pred_check_branch
      %43 = sbr.rel (0) target = $region13
    $region12: #{tpu_custom_call.1} parent=1 // pred_region
      %s45 = ssub.s32 512, 512
      %46 = vsyncadd [#allocation6], %s45
      %s47 = sshll.u32 [#allocation7], 4
      %s48 = int_to_ptr.vmem [resolvable:$true] %s47
      %53 = dma.hbm_to_vmem [thread:$0]  %s2, 512, %s48, [#allocation6], 128, 128, 8
    $region13: #{tpu_custom_call.1} parent=1 // pred_fallthru
      _
    // Predicated region
    $region14: #{tpu_custom_call.1} parent=1 // pred_check
      _
    $region15: #{tpu_custom_call.1} parent=1 // pred_check_branch
      %55 = sbr.rel (0) target = $region17
    $region16: #{tpu_custom_call.1} parent=1 // pred_region
      %s57 = ssub.s32 16, 16
      %58 = vsyncadd [#allocation9], %s57
      %s60 = sshll.u32 [#allocation8], 4
      %s61 = int_to_ptr.vmem [resolvable:$true] %s60
      %63 = dma.hbm_to_vmem [thread:$0]  %s3, 16, %s61, [#allocation9]
    $region17: #{tpu_custom_call.1} parent=1 // pred_fallthru
      _
    // Predicated region
    $region18: #{tpu_custom_call.1} parent=1 // pred_check
      _
    $region19: #{tpu_custom_call.1} parent=1 // pred_check_branch
      %65 = sbr.rel (0) target = $region21
    $region20: #{tpu_custom_call.1} parent=1 // pred_region
      %s67 = ssub.s32 512, 512
      %68 = vsyncadd [#allocation9], %s67
      %s69 = sshll.u32 [#allocation10], 4
      %s70 = int_to_ptr.vmem [resolvable:$true] %s69
      %75 = dma.hbm_to_vmem [thread:$0]  %s4, 512, %s70, [#allocation9], 128, 128, 8
    $region21: #{tpu_custom_call.1} parent=1 // pred_fallthru
      _
    // Predicated region
    $region22: #{tpu_custom_call.1} parent=1 // pred_check
      _
    $region23: #{tpu_custom_call.1} parent=1 // pred_check_branch
      %77 = sbr.rel (0) target = $region25
    $region24: #{tpu_custom_call.1} parent=1 // pred_region
      %s79 = ssub.s32 768, 768
      %80 = vsyncadd [#allocation12], %s79
      %s81 = sshll.u32 [#allocation11], 4
      %s82 = int_to_ptr.vmem [resolvable:$true] %s81
      %87 = dma.hbm_to_vmem [thread:$0]  %s5, 768, %s82, [#allocation12], 128, 128, 8
    $region25: #{tpu_custom_call.1} parent=1 // pred_fallthru
      _
    // Predicated region
    $region26: #{tpu_custom_call.1} parent=1 // pred_check
      _
    $region27: #{tpu_custom_call.1} parent=1 // pred_check_branch
      %89 = sbr.rel (0) target = $region29
    $region28: #{tpu_custom_call.1} parent=1 // pred_region
      %s91 = ssub.s32 16, 16
      %92 = vsyncadd [#allocation12], %s91
      %s94 = sshll.u32 [#allocation13], 4
      %s95 = int_to_ptr.vmem [resolvable:$true] %s94
      %97 = dma.hbm_to_vmem [thread:$0]  %s6, 16, %s95, [#allocation12]
    $region29: #{tpu_custom_call.1} parent=1 // pred_fallthru
      _
    // Predicated region
    $region30: #{tpu_custom_call.1} parent=1 // pred_check
      _
    $region31: #{tpu_custom_call.1} parent=1 // pred_check_branch
      %99 = sbr.rel (0) target = $region33
    $region32: #{tpu_custom_call.1} parent=1 // pred_region
      %100 = dma.done [#allocation3], 32
    $region33: #{tpu_custom_call.1} parent=1 // pred_fallthru
      _
    // Predicated region
    $region34: #{tpu_custom_call.1} parent=1 // pred_check
      _
    $region35: #{tpu_custom_call.1} parent=1 // pred_check_branch
      %102 = sbr.rel (0) target = $region37
    $region36: #{tpu_custom_call.1} parent=1 // pred_region
      %103 = dma.done [#allocation6], 256
    $region37: #{tpu_custom_call.1} parent=1 // pred_fallthru
      _
    // Predicated region
    $region38: #{tpu_custom_call.1} parent=1 // pred_check
      _
    $region39: #{tpu_custom_call.1} parent=1 // pred_check_branch
      %105 = sbr.rel (0) target = $region41
    $region40: #{tpu_custom_call.1} parent=1 // pred_region
      %106 = dma.done [#allocation6], 512
    $region41: #{tpu_custom_call.1} parent=1 // pred_fallthru
      _
    // Predicated region
    $region42: #{tpu_custom_call.1} parent=1 // pred_check
      _
    $region43: #{tpu_custom_call.1} parent=1 // pred_check_branch
      %108 = sbr.rel (0) target = $region45
    $region44: #{tpu_custom_call.1} parent=1 // pred_region
      %109 = dma.done [#allocation9], 16
    $region45: #{tpu_custom_call.1} parent=1 // pred_fallthru
      _
    // Predicated region
    $region46: #{tpu_custom_call.1} parent=1 // pred_check
      _
    $region47: #{tpu_custom_call.1} parent=1 // pred_check_branch
      %111 = sbr.rel (0) target = $region49
    $region48: #{tpu_custom_call.1} parent=1 // pred_region
      %112 = dma.done [#allocation9], 512
    $region49: #{tpu_custom_call.1} parent=1 // pred_fallthru
      _
    // Predicated region
    $region50: #{tpu_custom_call.1} parent=1 // pred_check
      _
    $region51: #{tpu_custom_call.1} parent=1 // pred_check_branch
      %114 = sbr.rel (0) target = $region53
    $region52: #{tpu_custom_call.1} parent=1 // pred_region
      %115 = dma.done [#allocation12], 768
    $region53: #{tpu_custom_call.1} parent=1 // pred_fallthru
      _
    // Predicated region
    $region54: #{tpu_custom_call.1} parent=1 // pred_check
      _
    $region55: #{tpu_custom_call.1} parent=1 // pred_check_branch
      %117 = sbr.rel (0) target = $region57
    $region56: #{tpu_custom_call.1} parent=1 // pred_region
      %118 = dma.done [#allocation12], 16
    $region57: #{tpu_custom_call.1} parent=1 // pred_fallthru
      _
    %v119 = vld [vmem:[#allocation5] sm:$0xff]
    %v120 = vld [vmem:[#allocation5 + $0x8] sm:$0xff]
    %v121 = vld [vmem:[#allocation2] sm:$0x3]
    %v122 = vld [vmem:[#allocation7] sm:$0xff]
    %v123 = vld [vmem:[#allocation7 + $0x8] sm:$0xff]
    %v124 = vld [vmem:[#allocation7 + $0x10] sm:$0xff]
    %v125 = vld [vmem:[#allocation7 + $0x18] sm:$0xff]
    %v126 = vld [vmem:[#allocation8] sm:$0x1]
    %v128 = vlaneseq
    %v129 = vshrl.u32 %v128, 7
    %v130 = vsub.s32 0, %v129
    %v131 = vrot.slane %v126, %v130
    %vm133 = vcmask 261120
    %v135 = vsel %vm133, %v121, 0
    %137 = vmatprep.subr.mxu0 0.0
    %138 = vmatpush1.msra.mxu0 %v122
    %139 = vmatprep.subr.mxu0 0.0
    %140 = vmatpush1.msra.mxu0 %v123
    %141 = vmatprep.subr.mxu0 0.0
    %142 = vmatpush1.msra.mxu0 %v124
    %143 = vmatprep.subr.mxu0 0.0
    %144 = vmatpush1.msra.mxu0 %v125
    %145 = vmatprep.subr.mxu0 0.0
    %146 = vmatpush1.msra.mxu0 0.0
    %147 = vmatprep.subr.mxu0 0.0
    %148 = vmatpush1.msra.mxu0 0.0
    %149 = vmatprep.subr.mxu0 0.0
    %150 = vmatpush1.msra.mxu0 0.0
    %151 = vmatprep.subr.mxu0 0.0
    %152 = vmatpush1.msra.mxu0 0.0
    %153 = vmatprep.subr.mxu0 0.0
    %154 = vmatpush1.msra.mxu0 0.0
    %155 = vmatprep.subr.mxu0 0.0
    %156 = vmatpush1.msra.mxu0 0.0
    %157 = vmatprep.subr.mxu0 0.0
    %158 = vmatpush1.msra.mxu0 0.0
    %159 = vmatprep.subr.mxu0 0.0
    %160 = vmatpush1.msra.mxu0 0.0
    %161 = vmatprep.subr.mxu0 0.0
    %162 = vmatpush1.msra.mxu0 0.0
    %163 = vmatprep.subr.mxu0 0.0
    %164 = vmatpush1.msra.mxu0 0.0
    %165 = vmatprep.subr.mxu0 0.0
    %166 = vmatpush1.msra.mxu0 0.0
    %167 = vmatprep.subr.mxu0 0.0
    %168 = vmatpush1.msra.mxu0 0.0
    %169 = vmatprep.subr.mxu0 0.0
    %170 = vmatpush1.msra.mxu0 0.0
    %171 = vmatprep.subr.mxu0 0.0
    %172 = vmatpush1.msra.mxu0 0.0
    %173 = vmatprep.subr.mxu0 0.0
    %174 = vmatpush1.msra.mxu0 0.0
    %175 = vmatprep.subr.mxu0 0.0
    %176 = vmatpush1.msra.mxu0 0.0
    %177 = vmatprep.subr.mxu0 0.0
    %178 = vmatpush1.msra.mxu0 0.0
    %179 = vmatprep.subr.mxu0 0.0
    %180 = vmatpush1.msra.mxu0 0.0
    %181 = vmatprep.subr.mxu0 0.0
    %182 = vmatpush1.msra.mxu0 0.0
    %183 = vmatprep.subr.mxu0 0.0
    %184 = vmatpush1.msra.mxu0 0.0
    %185 = vmatprep.subr.mxu0 0.0
    %186 = vmatpush1.msra.mxu0 0.0
    %187 = vmatprep.subr.mxu0 0.0
    %188 = vmatpush1.msra.mxu0 0.0
    %189 = vmatprep.subr.mxu0 0.0
    %190 = vmatpush1.msra.mxu0 0.0
    %191 = vmatprep.subr.mxu0 0.0
    %192 = vmatpush1.msra.mxu0 0.0
    %193 = vmatprep.subr.mxu0 0.0
    %194 = vmatpush1.msra.mxu0 0.0
    %195 = vmatprep.subr.mxu0 0.0
    %196 = vmatpush1.msra.mxu0 0.0
    %197 = vmatprep.subr.mxu0 0.0
    %198 = vmatpush1.msra.mxu0 0.0
    %199 = vmatprep.subr.mxu0 0.0
    %200 = vmatpush1.msra.mxu0 0.0
    %201 = vmatprep.mubr.f32.mxu0 0.0
    %202 = vmatmul.mubr.f32.gmra.mrb[0].mxu0 %v135
    %v203 = vpop.f32.mrb[0].mxu0
    %v204 = vadd.f32 %v131, %v203
    %v205 = vpop.f32.mrb[0].mxu0
    %206 = vdwg.mxu0
    %v207 = vld [vmem:[#allocation10] sm:$0xff]
    %v208 = vld [vmem:[#allocation10 + $0x8] sm:$0xff]
    %v209 = vld [vmem:[#allocation10 + $0x10] sm:$0xff]
    %v210 = vld [vmem:[#allocation10 + $0x18] sm:$0xff]
    %v212 = vsel %vm133, %v204, 0
    %214 = vmatprep.subr.mxu0 0.0
    %215 = vmatpush1.msra.mxu0 %v207
    %216 = vmatprep.subr.mxu0 0.0
    %217 = vmatpush1.msra.mxu0 %v208
    %218 = vmatprep.subr.mxu0 0.0
    %219 = vmatpush1.msra.mxu0 %v209
    %220 = vmatprep.subr.mxu0 0.0
    %221 = vmatpush1.msra.mxu0 %v210
    %222 = vmatprep.subr.mxu0 0.0
    %223 = vmatpush1.msra.mxu0 0.0
    %224 = vmatprep.subr.mxu0 0.0
    %225 = vmatpush1.msra.mxu0 0.0
    %226 = vmatprep.subr.mxu0 0.0
    %227 = vmatpush1.msra.mxu0 0.0
    %228 = vmatprep.subr.mxu0 0.0
    %229 = vmatpush1.msra.mxu0 0.0
    %230 = vmatprep.subr.mxu0 0.0
    %231 = vmatpush1.msra.mxu0 0.0
    %232 = vmatprep.subr.mxu0 0.0
    %233 = vmatpush1.msra.mxu0 0.0
    %234 = vmatprep.subr.mxu0 0.0
    %235 = vmatpush1.msra.mxu0 0.0
    %236 = vmatprep.subr.mxu0 0.0
    %237 = vmatpush1.msra.mxu0 0.0
    %238 = vmatprep.subr.mxu0 0.0
    %239 = vmatpush1.msra.mxu0 0.0
    %240 = vmatprep.subr.mxu0 0.0
    %241 = vmatpush1.msra.mxu0 0.0
    %242 = vmatprep.subr.mxu0 0.0
    %243 = vmatpush1.msra.mxu0 0.0
    %244 = vmatprep.subr.mxu0 0.0
    %245 = vmatpush1.msra.mxu0 0.0
    %246 = vmatprep.subr.mxu0 0.0
    %247 = vmatpush1.msra.mxu0 0.0
    %248 = vmatprep.subr.mxu0 0.0
    %249 = vmatpush1.msra.mxu0 0.0
    %250 = vmatprep.subr.mxu0 0.0
    %251 = vmatpush1.msra.mxu0 0.0
    %252 = vmatprep.subr.mxu0 0.0
    %253 = vmatpush1.msra.mxu0 0.0
    %254 = vmatprep.subr.mxu0 0.0
    %255 = vmatpush1.msra.mxu0 0.0
    %256 = vmatprep.subr.mxu0 0.0
    %257 = vmatpush1.msra.mxu0 0.0
    %258 = vmatprep.subr.mxu0 0.0
    %259 = vmatpush1.msra.mxu0 0.0
    %260 = vmatprep.subr.mxu0 0.0
    %261 = vmatpush1.msra.mxu0 0.0
    %262 = vmatprep.subr.mxu0 0.0
    %263 = vmatpush1.msra.mxu0 0.0
    %264 = vmatprep.subr.mxu0 0.0
    %265 = vmatpush1.msra.mxu0 0.0
    %266 = vmatprep.subr.mxu0 0.0
    %267 = vmatpush1.msra.mxu0 0.0
    %268 = vmatprep.subr.mxu0 0.0
    %269 = vmatpush1.msra.mxu0 0.0
    %270 = vmatprep.subr.mxu0 0.0
    %271 = vmatpush1.msra.mxu0 0.0
    %272 = vmatprep.subr.mxu0 0.0
    %273 = vmatpush1.msra.mxu0 0.0
    %274 = vmatprep.subr.mxu0 0.0
    %275 = vmatpush1.msra.mxu0 0.0
    %276 = vmatprep.subr.mxu0 0.0
    %277 = vmatpush1.msra.mxu0 0.0
    %278 = vmatprep.mubr.f32.mxu0 0.0
    %279 = vmatmul.mubr.f32.gmra.mrb[0].mxu0 %v212
    %v280 = vpop.f32.mrb[0].mxu0
    %v281 = vadd.f32 0.0, %v280
    %v282 = vpop.f32.mrb[0].mxu0
    %283 = vdwg.mxu0
    %v286 = vunpack.c.l.s4 1966171168
    %v287 = vunpack.c.0.s8 %v286
    %v288 = vlaneseq
    %v289 = vshrl.u32 %v288, 7
    %v290 = vsub.s32 %v287, %v289
    %v291 = vrot.slane %v281, %v290
    %v292 = vcombine.high %v291, %v291
    %v294 = vunpack.c.l.s4 1966171168
    %v295 = vunpack.c.0.s8 %v294
    %v296 = vlaneseq
    %v297 = vshrl.u32 %v296, 7
    %v298 = vsub.s32 %v295, %v297
    %v299 = vrot.slane %v291, %v298
    %v301 = vunpack.c.l.s4 1966171168
    %v302 = vunpack.c.0.s8 %v301
    %v303 = vlaneseq
    %v304 = vshrl.u32 %v303, 7
    %v305 = vsub.s32 %v302, %v304
    %v306 = vrot.slane %v292, %v305
    %v307 = vlaneseq
    %v308 = vshrl.u32 %v307, 7
    %v309 = vsub.s32 0, %v308
    %v310 = vrot.slane %v299, %v309
    %v311 = vlaneseq
    %v312 = vshrl.u32 %v311, 7
    %v313 = vsub.s32 0, %v312
    %v314 = vrot.slane %v306, %v313
    %v317 = vmul.f32 %v119, %v310
    %v318 = vmul.f32 %v120, %v314
    %vm319 = vcmask 392192
    %v320 = vsel %vm319, %v317, 0.0
    %321 = vadd.xlane.f32.xlu0 %v320
    %v322 = vpop.xlane.xlu0 %321
    %v323 = vsel %vm319, %v318, 0.0
    %324 = vadd.xlane.f32.xlu0 %v323
    %v325 = vpop.xlane.xlu0 %324
    %v328 = vlaneseq
    %v329 = vand.u32 %v328, 127
    %v330 = vlaneseq
    %v331 = vshrl.u32 %v330, 7
    %v332 = vsub.s32 %v329, %v331
    %v333 = vrot.slane %v322, %v332
    %v334 = vlaneseq
    %v335 = vshrl.u32 %v334, 7
    %v336 = vsub.s32 %v329, %v335
    %v337 = vrot.slane %v325, %v336
    %vm338 = vcmask 1041409
    %v339 = vsel %vm338, %v337, %v333
    %vm341 = vcmask 58368
    %v342 = vsel %vm341, %v339, -inf
    %343 = vmax.xlane.f32.xlu0 %v342
    %v344 = vpop.xlane.xlu0 %343
    %v346 = vlaneseq
    %v347 = vshrl.u32 %v346, 7
    %v348 = vsub.s32 0, %v347
    %v349 = vrot.slane %v344, %v348
    %v350 = vlaneseq
    %v351 = vshrl.u32 %v350, 7
    %v352 = vsub.s32 1, %v351
    %v353 = vrot.slane %v344, %v352
    %v356 = vsub.f32 %v322, %v349
    %v357 = vsub.f32 %v325, %v353
    %v358 = vmul.f32 %v356, 1.442695
    %v359 = vpow.pop %v358
    %v360 = vmul.f32 %v357, 1.442695
    %v361 = vpow.pop %v360
    %364 = vset.pattern.permute.xlu0 0
    %365 = vperm.xlu0 %364, %v359
    %v366 = vpop.permute.xlu0 %365
    %367 = vset.pattern.permute.xlu0 0
    %368 = vperm.xlu0 %367, %v361
    %v369 = vpop.permute.xlu0 %368
    %v370 = vlaneseq
    %v371 = vshrl.u32 %v370, 7
    %v372 = vsub.s32 %v329, %v371
    %v373 = vrot.slane %v366, %v372
    %v374 = vlaneseq
    %v375 = vshrl.u32 %v374, 7
    %v376 = vsub.s32 %v329, %v375
    %v377 = vrot.slane %v369, %v376
    %v378 = vsel %vm338, %v377, %v373
    %v380 = vsel %vm341, %v378, 0.0
    %381 = vadd.xlane.f32.xlu0 %v380
    %v382 = vpop.xlane.xlu0 %381
    %v384 = vlaneseq
    %v385 = vshrl.u32 %v384, 7
    %v386 = vsub.s32 0, %v385
    %v387 = vrot.slane %v382, %v386
    %v388 = vlaneseq
    %v389 = vshrl.u32 %v388, 7
    %v390 = vsub.s32 1, %v389
    %v391 = vrot.slane %v382, %v390
    %v394 = vrcp.pop %v387
    %v395 = vmul.f32 %v359, %v394
    %v396 = vrcp.pop %v391
    %v397 = vmul.f32 %v361, %v396
    %399 = vset.pattern.permute.xlu0 0
    %400 = vperm.xlu0 %399, %v395
    %v401 = vpop.permute.xlu0 %400
    %404 = vset.pattern.permute.xlu0 0
    %405 = vperm.xlu0 %404, %v397
    %v406 = vpop.permute.xlu0 %405
    %v408 = vmul.f32 %v119, %v401
    %v409 = vmul.f32 %v120, %v406
    %v410 = vsel %vm319, %v408, 0.0
    %v411 = vrot.slane %v410, 4
    %v412 = vadd.f32 %v410, %v411
    %v413 = vrot.slane %v412, 2
    %v414 = vadd.f32 %v412, %v413
    %v415 = vrot.slane %v414, 1
    %v416 = vadd.f32 %v414, %v415
    %v417 = vsel %vm319, %v409, 0.0
    %v418 = vrot.slane %v417, 4
    %v419 = vadd.f32 %v417, %v418
    %v420 = vrot.slane %v419, 2
    %v421 = vadd.f32 %v419, %v420
    %v422 = vrot.slane %v421, 1
    %v423 = vadd.f32 %v421, %v422
    %v424 = vld [vmem:[#allocation11] sm:$0xff]
    %v425 = vld [vmem:[#allocation11 + $0x8] sm:$0xff]
    %v426 = vld [vmem:[#allocation11 + $0x10] sm:$0xff]
    %v427 = vld [vmem:[#allocation11 + $0x18] sm:$0xff]
    %v428 = vld [vmem:[#allocation11 + $0x20] sm:$0xff]
    %v429 = vld [vmem:[#allocation11 + $0x28] sm:$0xff]
    %v430 = vld [vmem:[#allocation13] sm:$0x1]
    %v432 = vlaneseq
    %v433 = vshrl.u32 %v432, 7
    %v434 = vsub.s32 0, %v433
    %v435 = vrot.slane %v430, %v434
    %v439 = vsel %vm338, %v423, %v416
    %v440 = vsel %vm319, %v439, 0
    %442 = vmatprep.subr.mxu0 0.0
    %443 = vmatpush1.msra.mxu0 %v424
    %444 = vmatprep.subr.mxu0 0.0
    %445 = vmatpush1.msra.mxu0 %v425
    %446 = vmatprep.subr.mxu0 0.0
    %447 = vmatpush1.msra.mxu0 %v426
    %448 = vmatprep.subr.mxu0 0.0
    %449 = vmatpush1.msra.mxu0 %v427
    %450 = vmatprep.subr.mxu0 0.0
    %451 = vmatpush1.msra.mxu0 %v428
    %452 = vmatprep.subr.mxu0 0.0
    %453 = vmatpush1.msra.mxu0 %v429
    %454 = vmatprep.subr.mxu0 0.0
    %455 = vmatpush1.msra.mxu0 0.0
    %456 = vmatprep.subr.mxu0 0.0
    %457 = vmatpush1.msra.mxu0 0.0
    %458 = vmatprep.subr.mxu0 0.0
    %459 = vmatpush1.msra.mxu0 0.0
    %460 = vmatprep.subr.mxu0 0.0
    %461 = vmatpush1.msra.mxu0 0.0
    %462 = vmatprep.subr.mxu0 0.0
    %463 = vmatpush1.msra.mxu0 0.0
    %464 = vmatprep.subr.mxu0 0.0
    %465 = vmatpush1.msra.mxu0 0.0
    %466 = vmatprep.subr.mxu0 0.0
    %467 = vmatpush1.msra.mxu0 0.0
    %468 = vmatprep.subr.mxu0 0.0
    %469 = vmatpush1.msra.mxu0 0.0
    %470 = vmatprep.subr.mxu0 0.0
    %471 = vmatpush1.msra.mxu0 0.0
    %472 = vmatprep.subr.mxu0 0.0
    %473 = vmatpush1.msra.mxu0 0.0
    %474 = vmatprep.subr.mxu0 0.0
    %475 = vmatpush1.msra.mxu0 0.0
    %476 = vmatprep.subr.mxu0 0.0
    %477 = vmatpush1.msra.mxu0 0.0
    %478 = vmatprep.subr.mxu0 0.0
    %479 = vmatpush1.msra.mxu0 0.0
    %480 = vmatprep.subr.mxu0 0.0
    %481 = vmatpush1.msra.mxu0 0.0
    %482 = vmatprep.subr.mxu0 0.0
    %483 = vmatpush1.msra.mxu0 0.0
    %484 = vmatprep.subr.mxu0 0.0
    %485 = vmatpush1.msra.mxu0 0.0
    %486 = vmatprep.subr.mxu0 0.0
    %487 = vmatpush1.msra.mxu0 0.0
    %488 = vmatprep.subr.mxu0 0.0
    %489 = vmatpush1.msra.mxu0 0.0
    %490 = vmatprep.subr.mxu0 0.0
    %491 = vmatpush1.msra.mxu0 0.0
    %492 = vmatprep.subr.mxu0 0.0
    %493 = vmatpush1.msra.mxu0 0.0
    %494 = vmatprep.subr.mxu0 0.0
    %495 = vmatpush1.msra.mxu0 0.0
    %496 = vmatprep.subr.mxu0 0.0
    %497 = vmatpush1.msra.mxu0 0.0
    %498 = vmatprep.subr.mxu0 0.0
    %499 = vmatpush1.msra.mxu0 0.0
    %500 = vmatprep.subr.mxu0 0.0
    %501 = vmatpush1.msra.mxu0 0.0
    %502 = vmatprep.subr.mxu0 0.0
    %503 = vmatpush1.msra.mxu0 0.0
    %504 = vmatprep.subr.mxu0 0.0
    %505 = vmatpush1.msra.mxu0 0.0
    %506 = vmatprep.mubr.f32.mxu0 0.0
    %507 = vmatmul.mubr.f32.gmra.mrb[0].mxu0 %v440
    %v508 = vpop.f32.mrb[0].mxu0
    %v509 = vadd.f32 %v435, %v508
    %v510 = vpop.f32.mrb[0].mxu0
    %511 = vdwg.mxu0
    %vm512 = vcmask 254976
    %513 = vst.msk [vmem:[#allocation14] sm:$0x3] %vm512, %v509
    %v514 = vlaneseq
    %v515 = vshrl.u32 %v514, 7
    %v516 = vsub.s32 %v329, %v515
    %v517 = vrot.slane %v401, %v516
    %v518 = vlaneseq
    %v519 = vshrl.u32 %v518, 7
    %v520 = vsub.s32 %v329, %v519
    %v521 = vrot.slane %v406, %v520
    %v522 = vsel %vm338, %v521, %v517
    %524 = vst.msk [vmem:[#allocation15] sm:$0x3] %vm341, %v522
    // Predicated region
    $region58: #{tpu_custom_call.1} parent=1 // pred_check
      _
    $region59: #{tpu_custom_call.1} parent=1 // pred_check_branch
      %526 = sbr.rel (0) target = $region61
    $region60: #{tpu_custom_call.1} parent=1 // pred_region
      %s528 = ssub.s32 32, 32
      %529 = vsyncadd [#allocation4], %s528
      %s531 = sshll.u32 [#allocation14], 4
      %s532 = int_to_ptr.vmem [resolvable:$true] %s531
      %534 = dma.vmem_to_hbm [thread:$0]  %s532, 32, %s7, [#allocation4]
    $region61: #{tpu_custom_call.1} parent=1 // pred_fallthru
      _
    // Predicated region
    $region62: #{tpu_custom_call.1} parent=1 // pred_check
      _
    $region63: #{tpu_custom_call.1} parent=1 // pred_check_branch
      %536 = sbr.rel (0) target = $region65
    $region64: #{tpu_custom_call.1} parent=1 // pred_region
      %s538 = ssub.s32 32, 32
      %539 = vsyncadd [#allocation16], %s538
      %s541 = sshll.u32 [#allocation15], 4
      %s542 = int_to_ptr.vmem [resolvable:$true] %s541
      %544 = dma.vmem_to_hbm [thread:$0]  %s542, 32, %s8, [#allocation16]
    $region65: #{tpu_custom_call.1} parent=1 // pred_fallthru
      _
    // Predicated region
    $region66: #{tpu_custom_call.1} parent=1 // pred_check
      _
    $region67: #{tpu_custom_call.1} parent=1 // pred_check_branch
      %546 = sbr.rel (0) target = $region69
    $region68: #{tpu_custom_call.1} parent=1 // pred_region
      %547 = dma.done [#allocation4], 32
    $region69: #{tpu_custom_call.1} parent=1 // pred_fallthru
      _
    // Predicated region
    $region70: #{tpu_custom_call.1} parent=1 // pred_check
      _
    $region71: #{tpu_custom_call.1} parent=1 // pred_check_branch
      %549 = sbr.rel (0) target = $region73
    $region72: #{tpu_custom_call.1} parent=1 // pred_region
      %550 = dma.done [#allocation16], 32
    $region73: #{tpu_custom_call.1} parent=1 // pred_fallthru
      _
    %551 = vsyncpa [#allocation3], 1
    %552 = vsyncpa [#allocation6], 1
    %553 = vsyncpa [#allocation9], 1
    %554 = vsyncpa [#allocation12], 1
    %555 = vsyncpa [#allocation4], 1
    %556 = vsyncpa [#allocation16], 1

</llo_original>
